<compile_context>
chip_gen: v7x
topology: tpu7x:2x2x1
jax: 0.10.0
libtpu: 0.0.40
codegen_flags: <defaults>
</compile_context>

<pallas_src>
import functools

import jax
import jax.numpy as jnp
from jax.experimental import pallas as pl
from jax.experimental.pallas import tpu as pltpu


def _round_up(v, m):
    return ((v + m - 1) // m) * m


# ---------------------------------------------------------------------------
# Fused kernel: encoder (matmul + bias + ReLU) -> prototypes -> negative
# squared Euclidean distances.  One grid step, everything stays in VMEM/vregs.
# ---------------------------------------------------------------------------
def _protonet_fused_kernel(x_ref, w_ref, b_ref, out_ref, zp_ref,
                           *, n_way, n_support, n_query):
    # Encoder: (N_pad, F_PAD) @ (F_PAD, D_PAD), f32 accumulation on the MXU,
    # bias + ReLU fused on the result (padded lanes stay exactly zero).
    z = jnp.dot(x_ref[...], w_ref[...], preferred_element_type=jnp.float32)
    z = jnp.maximum(z + b_ref[...], 0.0)            # (N_pad, D_PAD) f32, vregs

    ns_total = n_way * n_support
    nq_total = n_way * n_query

    # Prototypes: rows were re-ordered host-side to support-index-major /
    # class-minor, so each class' prototype is the mean over n_support
    # contiguous (n_way, D_PAD) chunks -- no per-class masked-row stores.
    proto = z[0:n_way]
    for s in range(1, n_support):                   # tiny static unroll
        proto = proto + z[s * n_way:(s + 1) * n_way]
    proto = proto * (1.0 / n_support)               # (n_way, D_PAD)

    zq = z[ns_total:ns_total + nq_total]            # (NQ, D_PAD), contiguous

    # Lane/sublane-dense padded prototype tile; padded rows are exactly zero
    # so the (sliced-away) padded score columns are cheap and finite.
    zp_ref[...] = jnp.zeros_like(zp_ref)
    zp_ref[0:n_way, :] = proto
    zp = zp_ref[...]                                # (NW_PAD, D_PAD)

    xx = jnp.sum(zq * zq, axis=1, keepdims=True)    # (NQ, 1)
    yy = jnp.sum(zp * zp, axis=1, keepdims=True)    # (NW_PAD, 1)
    # Contract dim 1 of both operands: no XLU transpose of zp in the epilogue.
    xy = jax.lax.dot_general(zq, zp, (((1,), (1,)), ((), ())),
                             preferred_element_type=jnp.float32)  # (NQ, NW_PAD)

    # scores = -euclidean_dist(q, p); padded columns are sliced away outside.
    out_ref[...] = -(xx - 2.0 * xy + jnp.transpose(yy))


# ---------------------------------------------------------------------------
# Static (per-model) param preparation: pad/cast W and bias once, not per call.
# ---------------------------------------------------------------------------
def prepare_encoder_params(w, b, *, compute_dtype=jnp.bfloat16):
    F, D = w.shape
    F_PAD = _round_up(F, 128)                       # lane dim of x / sublane of W
    D_PAD = _round_up(D, 128)                       # lane-dense feature dim
    w_p = jnp.zeros((F_PAD, D_PAD), compute_dtype).at[:F, :D].set(
        w.astype(compute_dtype))
    # Padded bias lanes must be exactly zero (ReLU keeps padded lanes at zero).
    b_p = jnp.zeros((1, D_PAD), jnp.float32).at[0, :D].set(b.astype(jnp.float32))
    return w_p, b_p


# ---------------------------------------------------------------------------
# Per-call wrapper: reorder + pad x, single pallas_call, slice padded columns.
# ---------------------------------------------------------------------------
def protonet_forward(x, w_p, b_p, *, n_way, n_support,
                     compute_dtype=jnp.bfloat16):
    # x: (n_way, n_support + n_query, C, H, W) -- NCHW images.
    n_query = x.shape[1] - n_support
    G = n_support + n_query
    NS = n_way * n_support
    NQ = n_way * n_query
    N = n_way * G

    F_PAD, D_PAD = w_p.shape
    NW_PAD = _round_up(n_way, 128)                  # lane-dense score output
    N_PAD = _round_up(N, 8)

    x_flat = x.reshape(n_way, G, -1).astype(compute_dtype)      # (n_way, G, F)
    F = x_flat.shape[-1]
    # Row reorder folded into the pad/cast: supports support-index-major
    # (class-minor), then queries class-major (matches the reference order).
    x_sup = jnp.transpose(x_flat[:, :n_support], (1, 0, 2)).reshape(NS, F)
    x_qry = x_flat[:, n_support:].reshape(NQ, F)
    x_rows = jnp.concatenate([x_sup, x_qry], axis=0)            # (N, F)
    x_p = jnp.zeros((N_PAD, F_PAD), compute_dtype).at[:N, :F].set(x_rows)

    kernel = functools.partial(
        _protonet_fused_kernel,
        n_way=n_way, n_support=n_support, n_query=n_query)

    itemsize = jnp.dtype(compute_dtype).itemsize
    scores_pad = pl.pallas_call(
        kernel,
        out_shape=jax.ShapeDtypeStruct((NQ, NW_PAD), jnp.float32),
        grid=(1,),                                   # single step; no pipeline needed
        in_specs=[
            pl.BlockSpec((N_PAD, F_PAD), lambda i: (0, 0)),   # x (full block)
            pl.BlockSpec((F_PAD, D_PAD), lambda i: (0, 0)),   # W (full block)
            pl.BlockSpec((1, D_PAD), lambda i: (0, 0)),       # bias
        ],
        out_specs=pl.BlockSpec((NQ, NW_PAD), lambda i: (0, 0)),
        scratch_shapes=[
            pltpu.VMEM((NW_PAD, D_PAD), jnp.float32),  # padded prototype tile
        ],
        compiler_params=pltpu.CompilerParams(
            dimension_semantics=("arbitrary",),
        ),
        cost_estimate=pl.CostEstimate(
            flops=2 * N_PAD * F_PAD * D_PAD + 2 * NQ * NW_PAD * D_PAD,
            transcendentals=0,
            bytes_accessed=(N_PAD * F_PAD + F_PAD * D_PAD) * itemsize
                           + D_PAD * 4 + NQ * NW_PAD * 4,
        ),
    )(x_p, w_p, b_p)

    return scores_pad[:, :n_way]


# ---------------------------------------------------------------------------
# Pure-JAX reference (mirrors the PyTorch module's forward).
# ---------------------------------------------------------------------------
def _reference(x, params, n_way, n_support, compute_dtype=jnp.float32):
    n_query = x.shape[1] - n_support
    x_flat = x.reshape(x.shape[0] * x.shape[1], -1)
    z = jnp.dot(x_flat.astype(compute_dtype), params["w"].astype(compute_dtype),
                preferred_element_type=jnp.float32)
    z = jnp.maximum(z + params["b"].astype(jnp.float32), 0.0)
    z_all = z.reshape(n_way, n_support + n_query, -1)
    z_proto = z_all[:, :n_support].mean(axis=1)
    z_query = z_all[:, n_support:].reshape(n_way * n_query, -1)
    xx = jnp.sum(z_query * z_query, axis=1, keepdims=True)
    yy = jnp.sum(z_proto * z_proto, axis=1)[None, :]
    xy = z_query @ z_proto.T
    return -(xx - 2.0 * xy + yy)


if __name__ == "__main__":
    n_way, n_support, n_query = 4, 2, 2
    C, H, W = 4, 16, 16
    D = 32                                           # encoder feature dim
    F = C * H * W

    key = jax.random.PRNGKey(0)
    kx, kw, kb = jax.random.split(key, 3)
    x = jax.random.normal(kx, (n_way, n_support + n_query, C, H, W), jnp.float32)
    params = {
        "w": jax.random.normal(kw, (F, D), jnp.float32) * 0.05,
        "b": jax.random.normal(kb, (D,), jnp.float32) * 0.01,
    }

    # Static pad/cast of the encoder params, done once outside the hot path.
    w_p, b_p = prepare_encoder_params(params["w"], params["b"])

    fwd = jax.jit(functools.partial(protonet_forward,
                                    n_way=n_way, n_support=n_support))
    scores = fwd(x, w_p, b_p)
    scores = jax.block_until_ready(scores)
    assert scores.shape == (n_way * n_query, n_way)

    # Tight check against a reference using the same bf16 encoder inputs.
    ref_matched = _reference(x, params, n_way, n_support,
                             compute_dtype=jnp.bfloat16)
    assert jnp.allclose(scores, ref_matched, atol=1e-2, rtol=1e-2)

    # Looser sanity check against the full-f32 reference (bf16 cast error only).
    ref_f32 = _reference(x, params, n_way, n_support, compute_dtype=jnp.float32)
    assert jnp.allclose(scores, ref_f32, atol=1.0, rtol=5e-2)

    print("KERNEL_OK")
</pallas_src>

<mosaic_0001>
module attributes {stable_mosaic.version = 11 : i64} {
  func.func @_protonet_fused_kernel(%arg0: i32, %arg1: memref<16x1024xbf16, #tpu.memory_space<vmem>>, %arg2: memref<1024x128xbf16, #tpu.memory_space<vmem>>, %arg3: memref<1x128xf32, #tpu.memory_space<vmem>>, %arg4: memref<8x128xf32, #tpu.memory_space<vmem>>, %arg5: memref<128x128xf32, #tpu.memory_space<vmem>>) attributes {dimension_semantics = [#tpu.dimension_semantics<arbitrary>], iteration_bounds = array<i64: 1>, scalar_prefetch = 0 : i64, scratch_operands = 1 : i64, tpu.core_type = #tpu.core_type<tc>, window_params = [{pipeline_mode = #tpu.pipeline_mode<synchronous>, transform_indices = @transform_0, window_bounds = array<i64: 16, 1024>}, {pipeline_mode = #tpu.pipeline_mode<synchronous>, transform_indices = @transform_1, window_bounds = array<i64: 1024, 128>}, {pipeline_mode = #tpu.pipeline_mode<synchronous>, transform_indices = @transform_2, window_bounds = array<i64: 1, 128>}, {pipeline_mode = #tpu.pipeline_mode<synchronous>, transform_indices = @transform_3, window_bounds = array<i64: 8, 128>}]} {
    %c0 = arith.constant 0 : index
    %c0_0 = arith.constant 0 : index
    %0 = vector.load %arg1[%c0, %c0_0] : memref<16x1024xbf16, #tpu.memory_space<vmem>>, vector<16x1024xbf16>
    %c0_1 = arith.constant 0 : index
    %c0_2 = arith.constant 0 : index
    %1 = vector.load %arg2[%c0_1, %c0_2] : memref<1024x128xbf16, #tpu.memory_space<vmem>>, vector<1024x128xbf16>
    %cst = arith.constant dense<0.000000e+00> : vector<16x128xf32>
    %2 = tpu.matmul %0, %1, %cst {dimension_numbers = #tpu.dot_dimension_numbers<[1], [0], [0], [1], [0, 0, 1, 1], [], []>} : vector<16x1024xbf16>, vector<1024x128xbf16>, vector<16x128xf32> -> vector<16x128xf32>
    %c0_3 = arith.constant 0 : index
    %c0_4 = arith.constant 0 : index
    %3 = vector.load %arg3[%c0_3, %c0_4] : memref<1x128xf32, #tpu.memory_space<vmem>>, vector<1x128xf32>
    %4 = vector.broadcast %3 : vector<1x128xf32> to vector<16x128xf32>
    %5 = arith.addf %2, %4 : vector<16x128xf32>
    %cst_5 = arith.constant 0.000000e+00 : f32
    %6 = vector.broadcast %cst_5 : f32 to vector<16x128xf32>
    %7 = arith.maximumf %5, %6 : vector<16x128xf32>
    %8 = vector.extract_strided_slice %7 {offsets = [0, 0], sizes = [4, 128], strides = [1, 1]} : vector<16x128xf32> to vector<4x128xf32>
    %9 = vector.extract_strided_slice %7 {offsets = [4, 0], sizes = [4, 128], strides = [1, 1]} : vector<16x128xf32> to vector<4x128xf32>
    %10 = arith.addf %8, %9 : vector<4x128xf32>
    %cst_6 = arith.constant 5.000000e-01 : f32
    %11 = vector.broadcast %cst_6 : f32 to vector<4x128xf32>
    %12 = arith.mulf %10, %11 : vector<4x128xf32>
    %13 = vector.extract_strided_slice %7 {offsets = [8, 0], sizes = [8, 128], strides = [1, 1]} : vector<16x128xf32> to vector<8x128xf32>
    %cst_7 = arith.constant 0.000000e+00 : f32
    %14 = vector.broadcast %cst_7 : f32 to vector<128x128xf32>
    %c0_8 = arith.constant 0 : index
    %c0_9 = arith.constant 0 : index
    %15 = vector.load %arg5[%c0_8, %c0_9] : memref<128x128xf32, #tpu.memory_space<vmem>>, vector<128x128xf32>
    tpu.vector_store %arg5[%c0_8, %c0_9], %14 {strides = array<i32>} : memref<128x128xf32, #tpu.memory_space<vmem>>, vector<128x128xf32>,
    %c0_10 = arith.constant 0 : index
    %c0_11 = arith.constant 0 : index
    %16 = vector.load %arg5[%c0_10, %c0_11] : memref<128x128xf32, #tpu.memory_space<vmem>>, vector<4x128xf32>
    tpu.vector_store %arg5[%c0_10, %c0_11], %12 {strides = array<i32>} : memref<128x128xf32, #tpu.memory_space<vmem>>, vector<4x128xf32>,
    %c0_12 = arith.constant 0 : index
    %c0_13 = arith.constant 0 : index
    %17 = vector.load %arg5[%c0_12, %c0_13] : memref<128x128xf32, #tpu.memory_space<vmem>>, vector<128x128xf32>
    %18 = arith.mulf %13, %13 : vector<8x128xf32>
    %cst_14 = arith.constant dense<0.000000e+00> : vector<8xf32>
    %19 = vector.multi_reduction <add>, %18, %cst_14 [1] : vector<8x128xf32> to vector<8xf32>
    %20 = vector.shape_cast %19 : vector<8xf32> to vector<8x1xf32>
    %21 = arith.mulf %17, %17 : vector<128x128xf32>
    %cst_15 = arith.constant dense<0.000000e+00> : vector<128xf32>
    %22 = vector.multi_reduction <add>, %21, %cst_15 [1] : vector<128x128xf32> to vector<128xf32>
    %23 = vector.shape_cast %22 : vector<128xf32> to vector<128x1xf32>
    %cst_16 = arith.constant dense<0.000000e+00> : vector<8x128xf32>
    %24 = tpu.matmul %13, %17, %cst_16 {dimension_numbers = #tpu.dot_dimension_numbers<[1], [1], [0], [0], [0, 0, 1, 0], [], []>} : vector<8x128xf32>, vector<128x128xf32>, vector<8x128xf32> -> vector<8x128xf32>
    %cst_17 = arith.constant 2.000000e+00 : f32
    %25 = vector.broadcast %cst_17 : f32 to vector<8x128xf32>
    %26 = arith.mulf %25, %24 : vector<8x128xf32>
    %27 = vector.broadcast %20 : vector<8x1xf32> to vector<8x128xf32>
    %28 = arith.subf %27, %26 : vector<8x128xf32>
    %29 = tpu.transpose %23, [1, 0] : vector<128x1xf32> -> vector<1x128xf32>
    %30 = vector.broadcast %29 : vector<1x128xf32> to vector<8x128xf32>
    %31 = arith.addf %28, %30 : vector<8x128xf32>
    %cst_18 = arith.constant 0.000000e+00 : f32
    %32 = vector.broadcast %cst_18 : f32 to vector<8x128xf32>
    %33 = arith.subf %32, %31 : vector<8x128xf32>
    %c0_19 = arith.constant 0 : index
    %c0_20 = arith.constant 0 : index
    %34 = vector.load %arg4[%c0_19, %c0_20] : memref<8x128xf32, #tpu.memory_space<vmem>>, vector<8x128xf32>
    tpu.vector_store %arg4[%c0_19, %c0_20], %33 {strides = array<i32>} : memref<8x128xf32, #tpu.memory_space<vmem>>, vector<8x128xf32>,
    return
  }
  func.func @transform_0(%arg0: i32) -> (i32, i32) {
    %c0_i32 = arith.constant 0 : i32
    %c0_i32_0 = arith.constant 0 : i32
    %c0_i32_1 = arith.constant 0 : i32
    return %c0_i32, %c0_i32_0 : i32, i32
  }
  func.func @transform_1(%arg0: i32) -> (i32, i32) {
    %c0_i32 = arith.constant 0 : i32
    %c0_i32_0 = arith.constant 0 : i32
    %c0_i32_1 = arith.constant 0 : i32
    return %c0_i32, %c0_i32_0 : i32, i32
  }
  func.func @transform_2(%arg0: i32) -> (i32, i32) {
    %c0_i32 = arith.constant 0 : i32
    %c0_i32_0 = arith.constant 0 : i32
    %c0_i32_1 = arith.constant 0 : i32
    return %c0_i32, %c0_i32_0 : i32, i32
  }
  func.func @transform_3(%arg0: i32) -> (i32, i32) {
    %c0_i32 = arith.constant 0 : i32
    %c0_i32_0 = arith.constant 0 : i32
    %c0_i32_1 = arith.constant 0 : i32
    return %c0_i32, %c0_i32_0 : i32, i32
  }
}

</mosaic_0001>

<llo_original>
// kernel: protonet_forward.1
$region0: #{protonet_forward.1}
  #allocation0 [shape = 'u32[]', space=smem, size = 0x4, offset = 0x4, fixed_abs, tag = 'smem constant byte address 0x4 - core index']
  #allocation1 [shape = 'u32[144,128]{1,0:T(1,128)}', space=vmem, size = 0x12000, scoped, tag = 'internal scratch']
  #allocation2 [shape = 'f32[128,128]{1,0:T(8,128)}', space=vmem, size = 0x10000, scoped, tag = 'scratch operand']
  %s0 = inlined_call_operand.vmem [shape: bf16[16,1024], index: 0, kind: input, shape index: {}]
  %s1 = inlined_call_operand.vmem [shape: bf16[1024,128], index: 1, kind: input, shape index: {}]
  %s2 = inlined_call_operand.vmem [shape: f32[1,128], index: 2, kind: input, shape index: {}]
  %s3 = inlined_call_operand.vmem [shape: f32[8,128], index: 3, kind: output, shape index: {}]
  %s4 = sld [smem:[#allocation0]]
  $region22: #{protonet_forward.1} parent=0
    _
  %s6 = ssub.s32 1, %s4
  %s7 = scalar_select 0, %s6, %s4
  // Predicated region
  $region2: #{protonet_forward.1} parent=0 // pred_check
    _
  $region3: #{protonet_forward.1} parent=0 // pred_check_branch
    %9 = sbr.rel (0) target = $region5
  $region4: #{protonet_forward.1} parent=0 // pred_region
    _
  $region5: #{protonet_forward.1} parent=0 // pred_fallthru
    _
  // Predicated region
  $region6: #{protonet_forward.1} parent=0 // pred_check
    _
  $region7: #{protonet_forward.1} parent=0 // pred_check_branch
    %11 = sbr.rel (0) target = $region9
  $region8: #{protonet_forward.1} parent=0 // pred_region
    _
  $region9: #{protonet_forward.1} parent=0 // pred_fallthru
    _
  // Predicated region
  $region10: #{protonet_forward.1} parent=0 // pred_check
    _
  $region11: #{protonet_forward.1} parent=0 // pred_check_branch
    %13 = sbr.rel (0) target = $region13
  $region12: #{protonet_forward.1} parent=0 // pred_region
    _
  $region13: #{protonet_forward.1} parent=0 // pred_fallthru
    _
  %v15 = vld [vmem:[%s0] sm:$0xff]
  %v16 = vld [vmem:[%s0 + $0x8] sm:$0xff]
  %v17 = vld [vmem:[%s0 + $0x10] sm:$0xff]
  %v18 = vld [vmem:[%s0 + $0x18] sm:$0xff]
  %v19 = vld [vmem:[%s0 + $0x20] sm:$0xff]
  %v20 = vld [vmem:[%s0 + $0x28] sm:$0xff]
  %v21 = vld [vmem:[%s0 + $0x30] sm:$0xff]
  %v22 = vld [vmem:[%s0 + $0x38] sm:$0xff]
  %v23 = vld [vmem:[%s1] sm:$0xf]
  %v24 = vld [vmem:[%s1 + $0x4] sm:$0xf]
  %v25 = vld [vmem:[%s1 + $0x8] sm:$0xf]
  %v26 = vld [vmem:[%s1 + $0xc] sm:$0xf]
  %v27 = vld [vmem:[%s1 + $0x10] sm:$0xf]
  %v28 = vld [vmem:[%s1 + $0x14] sm:$0xf]
  %v29 = vld [vmem:[%s1 + $0x18] sm:$0xf]
  %v30 = vld [vmem:[%s1 + $0x1c] sm:$0xf]
  %v31 = vld [vmem:[%s1 + $0x20] sm:$0xf]
  %v32 = vld [vmem:[%s1 + $0x24] sm:$0xf]
  %v33 = vld [vmem:[%s1 + $0x28] sm:$0xf]
  %v34 = vld [vmem:[%s1 + $0x2c] sm:$0xf]
  %v35 = vld [vmem:[%s1 + $0x30] sm:$0xf]
  %v36 = vld [vmem:[%s1 + $0x34] sm:$0xf]
  %v37 = vld [vmem:[%s1 + $0x38] sm:$0xf]
  %v38 = vld [vmem:[%s1 + $0x3c] sm:$0xf]
  %v39 = vld [vmem:[%s1 + $0x40] sm:$0xf]
  %v40 = vld [vmem:[%s1 + $0x44] sm:$0xf]
  %v41 = vld [vmem:[%s1 + $0x48] sm:$0xf]
  %v42 = vld [vmem:[%s1 + $0x4c] sm:$0xf]
  %v43 = vld [vmem:[%s1 + $0x50] sm:$0xf]
  %v44 = vld [vmem:[%s1 + $0x54] sm:$0xf]
  %v45 = vld [vmem:[%s1 + $0x58] sm:$0xf]
  %v46 = vld [vmem:[%s1 + $0x5c] sm:$0xf]
  %v47 = vld [vmem:[%s1 + $0x60] sm:$0xf]
  %v48 = vld [vmem:[%s1 + $0x64] sm:$0xf]
  %v49 = vld [vmem:[%s1 + $0x68] sm:$0xf]
  %v50 = vld [vmem:[%s1 + $0x6c] sm:$0xf]
  %v51 = vld [vmem:[%s1 + $0x70] sm:$0xf]
  %v52 = vld [vmem:[%s1 + $0x74] sm:$0xf]
  %v53 = vld [vmem:[%s1 + $0x78] sm:$0xf]
  %v54 = vld [vmem:[%s1 + $0x7c] sm:$0xf]
  %v55 = vld [vmem:[%s1 + $0x80] sm:$0xf]
  %v56 = vld [vmem:[%s1 + $0x84] sm:$0xf]
  %v57 = vld [vmem:[%s1 + $0x88] sm:$0xf]
  %v58 = vld [vmem:[%s1 + $0x8c] sm:$0xf]
  %v59 = vld [vmem:[%s1 + $0x90] sm:$0xf]
  %v60 = vld [vmem:[%s1 + $0x94] sm:$0xf]
  %v61 = vld [vmem:[%s1 + $0x98] sm:$0xf]
  %v62 = vld [vmem:[%s1 + $0x9c] sm:$0xf]
  %v63 = vld [vmem:[%s1 + $0xa0] sm:$0xf]
  %v64 = vld [vmem:[%s1 + $0xa4] sm:$0xf]
  %v65 = vld [vmem:[%s1 + $0xa8] sm:$0xf]
  %v66 = vld [vmem:[%s1 + $0xac] sm:$0xf]
  %v67 = vld [vmem:[%s1 + $0xb0] sm:$0xf]
  %v68 = vld [vmem:[%s1 + $0xb4] sm:$0xf]
  %v69 = vld [vmem:[%s1 + $0xb8] sm:$0xf]
  %v70 = vld [vmem:[%s1 + $0xbc] sm:$0xf]
  %v71 = vld [vmem:[%s1 + $0xc0] sm:$0xf]
  %v72 = vld [vmem:[%s1 + $0xc4] sm:$0xf]
  %v73 = vld [vmem:[%s1 + $0xc8] sm:$0xf]
  %v74 = vld [vmem:[%s1 + $0xcc] sm:$0xf]
  %v75 = vld [vmem:[%s1 + $0xd0] sm:$0xf]
  %v76 = vld [vmem:[%s1 + $0xd4] sm:$0xf]
  %v77 = vld [vmem:[%s1 + $0xd8] sm:$0xf]
  %v78 = vld [vmem:[%s1 + $0xdc] sm:$0xf]
  %v79 = vld [vmem:[%s1 + $0xe0] sm:$0xf]
  %v80 = vld [vmem:[%s1 + $0xe4] sm:$0xf]
  %v81 = vld [vmem:[%s1 + $0xe8] sm:$0xf]
  %v82 = vld [vmem:[%s1 + $0xec] sm:$0xf]
  %v83 = vld [vmem:[%s1 + $0xf0] sm:$0xf]
  %v84 = vld [vmem:[%s1 + $0xf4] sm:$0xf]
  %v85 = vld [vmem:[%s1 + $0xf8] sm:$0xf]
  %v86 = vld [vmem:[%s1 + $0xfc] sm:$0xf]
  %v87 = vld [vmem:[%s1 + $0x100] sm:$0xf]
  %v88 = vld [vmem:[%s1 + $0x104] sm:$0xf]
  %v89 = vld [vmem:[%s1 + $0x108] sm:$0xf]
  %v90 = vld [vmem:[%s1 + $0x10c] sm:$0xf]
  %v91 = vld [vmem:[%s1 + $0x110] sm:$0xf]
  %v92 = vld [vmem:[%s1 + $0x114] sm:$0xf]
  %v93 = vld [vmem:[%s1 + $0x118] sm:$0xf]
  %v94 = vld [vmem:[%s1 + $0x11c] sm:$0xf]
  %v95 = vld [vmem:[%s1 + $0x120] sm:$0xf]
  %v96 = vld [vmem:[%s1 + $0x124] sm:$0xf]
  %v97 = vld [vmem:[%s1 + $0x128] sm:$0xf]
  %v98 = vld [vmem:[%s1 + $0x12c] sm:$0xf]
  %v99 = vld [vmem:[%s1 + $0x130] sm:$0xf]
  %v100 = vld [vmem:[%s1 + $0x134] sm:$0xf]
  %v101 = vld [vmem:[%s1 + $0x138] sm:$0xf]
  %v102 = vld [vmem:[%s1 + $0x13c] sm:$0xf]
  %v103 = vld [vmem:[%s1 + $0x140] sm:$0xf]
  %v104 = vld [vmem:[%s1 + $0x144] sm:$0xf]
  %v105 = vld [vmem:[%s1 + $0x148] sm:$0xf]
  %v106 = vld [vmem:[%s1 + $0x14c] sm:$0xf]
  %v107 = vld [vmem:[%s1 + $0x150] sm:$0xf]
  %v108 = vld [vmem:[%s1 + $0x154] sm:$0xf]
  %v109 = vld [vmem:[%s1 + $0x158] sm:$0xf]
  %v110 = vld [vmem:[%s1 + $0x15c] sm:$0xf]
  %v111 = vld [vmem:[%s1 + $0x160] sm:$0xf]
  %v112 = vld [vmem:[%s1 + $0x164] sm:$0xf]
  %v113 = vld [vmem:[%s1 + $0x168] sm:$0xf]
  %v114 = vld [vmem:[%s1 + $0x16c] sm:$0xf]
  %v115 = vld [vmem:[%s1 + $0x170] sm:$0xf]
  %v116 = vld [vmem:[%s1 + $0x174] sm:$0xf]
  %v117 = vld [vmem:[%s1 + $0x178] sm:$0xf]
  %v118 = vld [vmem:[%s1 + $0x17c] sm:$0xf]
  %v119 = vld [vmem:[%s1 + $0x180] sm:$0xf]
  %v120 = vld [vmem:[%s1 + $0x184] sm:$0xf]
  %v121 = vld [vmem:[%s1 + $0x188] sm:$0xf]
  %v122 = vld [vmem:[%s1 + $0x18c] sm:$0xf]
  %v123 = vld [vmem:[%s1 + $0x190] sm:$0xf]
  %v124 = vld [vmem:[%s1 + $0x194] sm:$0xf]
  %v125 = vld [vmem:[%s1 + $0x198] sm:$0xf]
  %v126 = vld [vmem:[%s1 + $0x19c] sm:$0xf]
  %v127 = vld [vmem:[%s1 + $0x1a0] sm:$0xf]
  %v128 = vld [vmem:[%s1 + $0x1a4] sm:$0xf]
  %v129 = vld [vmem:[%s1 + $0x1a8] sm:$0xf]
  %v130 = vld [vmem:[%s1 + $0x1ac] sm:$0xf]
  %v131 = vld [vmem:[%s1 + $0x1b0] sm:$0xf]
  %v132 = vld [vmem:[%s1 + $0x1b4] sm:$0xf]
  %v133 = vld [vmem:[%s1 + $0x1b8] sm:$0xf]
  %v134 = vld [vmem:[%s1 + $0x1bc] sm:$0xf]
  %v135 = vld [vmem:[%s1 + $0x1c0] sm:$0xf]
  %v136 = vld [vmem:[%s1 + $0x1c4] sm:$0xf]
  %v137 = vld [vmem:[%s1 + $0x1c8] sm:$0xf]
  %v138 = vld [vmem:[%s1 + $0x1cc] sm:$0xf]
  %v139 = vld [vmem:[%s1 + $0x1d0] sm:$0xf]
  %v140 = vld [vmem:[%s1 + $0x1d4] sm:$0xf]
  %v141 = vld [vmem:[%s1 + $0x1d8] sm:$0xf]
  %v142 = vld [vmem:[%s1 + $0x1dc] sm:$0xf]
  %v143 = vld [vmem:[%s1 + $0x1e0] sm:$0xf]
  %v144 = vld [vmem:[%s1 + $0x1e4] sm:$0xf]
  %v145 = vld [vmem:[%s1 + $0x1e8] sm:$0xf]
  %v146 = vld [vmem:[%s1 + $0x1ec] sm:$0xf]
  %v147 = vld [vmem:[%s1 + $0x1f0] sm:$0xf]
  %v148 = vld [vmem:[%s1 + $0x1f4] sm:$0xf]
  %v149 = vld [vmem:[%s1 + $0x1f8] sm:$0xf]
  %v150 = vld [vmem:[%s1 + $0x1fc] sm:$0xf]
  %v151 = vld [vmem:[%s2] sm:$0x1]
  %v153 = vlaneseq
  %v154 = vshrl.u32 %v153, 7
  %v155 = vsub.s32 0, %v154
  %v156 = vrot.slane %v151, %v155
  %v166 = vunpack.c.l.b16 %v15
  %v167 = vunpack.c.h.b16 %v15
  %v168 = vunpack.c.l.b16 %v16
  %v169 = vunpack.c.h.b16 %v16
  %v170 = vunpack.c.l.b16 %v17
  %v171 = vunpack.c.h.b16 %v17
  %v172 = vunpack.c.l.b16 %v18
  %v173 = vunpack.c.h.b16 %v18
  %v174 = vunpack.c.l.b16 %v19
  %v175 = vunpack.c.h.b16 %v19
  %v176 = vunpack.c.l.b16 %v20
  %v177 = vunpack.c.h.b16 %v20
  %v178 = vunpack.c.l.b16 %v21
  %v179 = vunpack.c.h.b16 %v21
  %v180 = vunpack.c.l.b16 %v22
  %v181 = vunpack.c.h.b16 %v22
  %v182 = vpack.c.b16 %v174, %v166
  %v183 = vpack.c.b16 %v175, %v167
  %v184 = vpack.c.b16 %v176, %v168
  %v185 = vpack.c.b16 %v177, %v169
  %v186 = vpack.c.b16 %v178, %v170
  %v187 = vpack.c.b16 %v179, %v171
  %v188 = vpack.c.b16 %v180, %v172
  %v189 = vpack.c.b16 %v181, %v173
  %v326 = vunpack.c.l.b16 %v23
  %v327 = vunpack.c.l.b16 %v24
  %v328 = vunpack.c.l.b16 %v25
  %v329 = vunpack.c.l.b16 %v26
  %v330 = vunpack.c.l.b16 %v27
  %v331 = vunpack.c.l.b16 %v28
  %v332 = vunpack.c.l.b16 %v29
  %v333 = vunpack.c.l.b16 %v30
  %v334 = vunpack.c.l.b16 %v31
  %v335 = vunpack.c.l.b16 %v32
  %v336 = vunpack.c.l.b16 %v33
  %v337 = vunpack.c.l.b16 %v34
  %v338 = vunpack.c.l.b16 %v35
  %v339 = vunpack.c.l.b16 %v36
  %v340 = vunpack.c.l.b16 %v37
  %v341 = vunpack.c.l.b16 %v38
  %v342 = vunpack.c.l.b16 %v39
  %v343 = vunpack.c.l.b16 %v40
  %v344 = vunpack.c.l.b16 %v41
  %v345 = vunpack.c.l.b16 %v42
  %v346 = vunpack.c.l.b16 %v43
  %v347 = vunpack.c.l.b16 %v44
  %v348 = vunpack.c.l.b16 %v45
  %v349 = vunpack.c.l.b16 %v46
  %v350 = vunpack.c.l.b16 %v47
  %v351 = vunpack.c.l.b16 %v48
  %v352 = vunpack.c.l.b16 %v49
  %v353 = vunpack.c.l.b16 %v50
  %v354 = vunpack.c.l.b16 %v51
  %v355 = vunpack.c.l.b16 %v52
  %v356 = vunpack.c.l.b16 %v53
  %v357 = vunpack.c.l.b16 %v54
  %v358 = vunpack.c.l.b16 %v55
  %v359 = vunpack.c.l.b16 %v56
  %v360 = vunpack.c.l.b16 %v57
  %v361 = vunpack.c.l.b16 %v58
  %v362 = vunpack.c.l.b16 %v59
  %v363 = vunpack.c.l.b16 %v60
  %v364 = vunpack.c.l.b16 %v61
  %v365 = vunpack.c.l.b16 %v62
  %v366 = vunpack.c.l.b16 %v63
  %v367 = vunpack.c.l.b16 %v64
  %v368 = vunpack.c.l.b16 %v65
  %v369 = vunpack.c.l.b16 %v66
  %v370 = vunpack.c.l.b16 %v67
  %v371 = vunpack.c.l.b16 %v68
  %v372 = vunpack.c.l.b16 %v69
  %v373 = vunpack.c.l.b16 %v70
  %v374 = vunpack.c.l.b16 %v71
  %v375 = vunpack.c.l.b16 %v72
  %v376 = vunpack.c.l.b16 %v73
  %v377 = vunpack.c.l.b16 %v74
  %v378 = vunpack.c.l.b16 %v75
  %v379 = vunpack.c.l.b16 %v76
  %v380 = vunpack.c.l.b16 %v77
  %v381 = vunpack.c.l.b16 %v78
  %v382 = vunpack.c.l.b16 %v79
  %v383 = vunpack.c.l.b16 %v80
  %v384 = vunpack.c.l.b16 %v81
  %v385 = vunpack.c.l.b16 %v82
  %v386 = vunpack.c.l.b16 %v83
  %v387 = vunpack.c.l.b16 %v84
  %v388 = vunpack.c.l.b16 %v85
  %v389 = vunpack.c.l.b16 %v86
  %v390 = vunpack.c.l.b16 %v87
  %v391 = vunpack.c.l.b16 %v88
  %v392 = vunpack.c.l.b16 %v89
  %v393 = vunpack.c.l.b16 %v90
  %v394 = vunpack.c.l.b16 %v91
  %v395 = vunpack.c.l.b16 %v92
  %v396 = vunpack.c.l.b16 %v93
  %v397 = vunpack.c.l.b16 %v94
  %v398 = vunpack.c.l.b16 %v95
  %v399 = vunpack.c.l.b16 %v96
  %v400 = vunpack.c.l.b16 %v97
  %v401 = vunpack.c.l.b16 %v98
  %v402 = vunpack.c.l.b16 %v99
  %v403 = vunpack.c.l.b16 %v100
  %v404 = vunpack.c.l.b16 %v101
  %v405 = vunpack.c.l.b16 %v102
  %v406 = vunpack.c.l.b16 %v103
  %v407 = vunpack.c.l.b16 %v104
  %v408 = vunpack.c.l.b16 %v105
  %v409 = vunpack.c.l.b16 %v106
  %v410 = vunpack.c.l.b16 %v107
  %v411 = vunpack.c.l.b16 %v108
  %v412 = vunpack.c.l.b16 %v109
  %v413 = vunpack.c.l.b16 %v110
  %v414 = vunpack.c.l.b16 %v111
  %v415 = vunpack.c.l.b16 %v112
  %v416 = vunpack.c.l.b16 %v113
  %v417 = vunpack.c.l.b16 %v114
  %v418 = vunpack.c.l.b16 %v115
  %v419 = vunpack.c.l.b16 %v116
  %v420 = vunpack.c.l.b16 %v117
  %v421 = vunpack.c.l.b16 %v118
  %v422 = vunpack.c.l.b16 %v119
  %v423 = vunpack.c.l.b16 %v120
  %v424 = vunpack.c.l.b16 %v121
  %v425 = vunpack.c.l.b16 %v122
  %v426 = vunpack.c.l.b16 %v123
  %v427 = vunpack.c.l.b16 %v124
  %v428 = vunpack.c.l.b16 %v125
  %v429 = vunpack.c.l.b16 %v126
  %v430 = vunpack.c.l.b16 %v127
  %v431 = vunpack.c.l.b16 %v128
  %v432 = vunpack.c.l.b16 %v129
  %v433 = vunpack.c.l.b16 %v130
  %v434 = vunpack.c.l.b16 %v131
  %v435 = vunpack.c.l.b16 %v132
  %v436 = vunpack.c.l.b16 %v133
  %v437 = vunpack.c.l.b16 %v134
  %v438 = vunpack.c.l.b16 %v135
  %v439 = vunpack.c.l.b16 %v136
  %v440 = vunpack.c.l.b16 %v137
  %v441 = vunpack.c.l.b16 %v138
  %v442 = vunpack.c.l.b16 %v139
  %v443 = vunpack.c.l.b16 %v140
  %v444 = vunpack.c.l.b16 %v141
  %v445 = vunpack.c.l.b16 %v142
  %v446 = vunpack.c.l.b16 %v143
  %v447 = vunpack.c.l.b16 %v144
  %v448 = vunpack.c.l.b16 %v145
  %v449 = vunpack.c.l.b16 %v146
  %v450 = vunpack.c.l.b16 %v147
  %v451 = vunpack.c.l.b16 %v148
  %v452 = vunpack.c.l.b16 %v149
  %v453 = vunpack.c.l.b16 %v150
  %v454 = vpack.c.b16 %v327, %v326
  %v455 = vpack.c.b16 %v329, %v328
  %v456 = vpack.c.b16 %v331, %v330
  %v457 = vpack.c.b16 %v333, %v332
  %v458 = vpack.c.b16 %v335, %v334
  %v459 = vpack.c.b16 %v337, %v336
  %v460 = vpack.c.b16 %v339, %v338
  %v461 = vpack.c.b16 %v341, %v340
  %v462 = vpack.c.b16 %v343, %v342
  %v463 = vpack.c.b16 %v345, %v344
  %v464 = vpack.c.b16 %v347, %v346
  %v465 = vpack.c.b16 %v349, %v348
  %v466 = vpack.c.b16 %v351, %v350
  %v467 = vpack.c.b16 %v353, %v352
  %v468 = vpack.c.b16 %v355, %v354
  %v469 = vpack.c.b16 %v357, %v356
  %v470 = vpack.c.b16 %v359, %v358
  %v471 = vpack.c.b16 %v361, %v360
  %v472 = vpack.c.b16 %v363, %v362
  %v473 = vpack.c.b16 %v365, %v364
  %v474 = vpack.c.b16 %v367, %v366
  %v475 = vpack.c.b16 %v369, %v368
  %v476 = vpack.c.b16 %v371, %v370
  %v477 = vpack.c.b16 %v373, %v372
  %v478 = vpack.c.b16 %v375, %v374
  %v479 = vpack.c.b16 %v377, %v376
  %v480 = vpack.c.b16 %v379, %v378
  %v481 = vpack.c.b16 %v381, %v380
  %v482 = vpack.c.b16 %v383, %v382
  %v483 = vpack.c.b16 %v385, %v384
  %v484 = vpack.c.b16 %v387, %v386
  %v485 = vpack.c.b16 %v389, %v388
  %v486 = vpack.c.b16 %v391, %v390
  %v487 = vpack.c.b16 %v393, %v392
  %v488 = vpack.c.b16 %v395, %v394
  %v489 = vpack.c.b16 %v397, %v396
  %v490 = vpack.c.b16 %v399, %v398
  %v491 = vpack.c.b16 %v401, %v400
  %v492 = vpack.c.b16 %v403, %v402
  %v493 = vpack.c.b16 %v405, %v404
  %v494 = vpack.c.b16 %v407, %v406
  %v495 = vpack.c.b16 %v409, %v408
  %v496 = vpack.c.b16 %v411, %v410
  %v497 = vpack.c.b16 %v413, %v412
  %v498 = vpack.c.b16 %v415, %v414
  %v499 = vpack.c.b16 %v417, %v416
  %v500 = vpack.c.b16 %v419, %v418
  %v501 = vpack.c.b16 %v421, %v420
  %v502 = vpack.c.b16 %v423, %v422
  %v503 = vpack.c.b16 %v425, %v424
  %v504 = vpack.c.b16 %v427, %v426
  %v505 = vpack.c.b16 %v429, %v428
  %v506 = vpack.c.b16 %v431, %v430
  %v507 = vpack.c.b16 %v433, %v432
  %v508 = vpack.c.b16 %v435, %v434
  %v509 = vpack.c.b16 %v437, %v436
  %v510 = vpack.c.b16 %v439, %v438
  %v511 = vpack.c.b16 %v441, %v440
  %v512 = vpack.c.b16 %v443, %v442
  %v513 = vpack.c.b16 %v445, %v444
  %v514 = vpack.c.b16 %v447, %v446
  %v515 = vpack.c.b16 %v449, %v448
  %v516 = vpack.c.b16 %v451, %v450
  %v517 = vpack.c.b16 %v453, %v452
  %582 = vmatprep.subr.bf16.mxu0 0
  %583 = vmatpush1.bf16.msra.mxu0 %v454
  %584 = vmatprep.subr.bf16.mxu0 0
  %585 = vmatpush1.bf16.msra.mxu0 %v455
  %586 = vmatprep.subr.bf16.mxu0 0
  %587 = vmatpush1.bf16.msra.mxu0 %v456
  %588 = vmatprep.subr.bf16.mxu0 0
  %589 = vmatpush1.bf16.msra.mxu0 %v457
  %590 = vmatprep.subr.bf16.mxu0 0
  %591 = vmatpush1.bf16.msra.mxu0 %v458
  %592 = vmatprep.subr.bf16.mxu0 0
  %593 = vmatpush1.bf16.msra.mxu0 %v459
  %594 = vmatprep.subr.bf16.mxu0 0
  %595 = vmatpush1.bf16.msra.mxu0 %v460
  %596 = vmatprep.subr.bf16.mxu0 0
  %597 = vmatpush1.bf16.msra.mxu0 %v461
  %598 = vmatprep.subr.bf16.mxu0 0
  %599 = vmatpush1.bf16.msra.mxu0 %v462
  %600 = vmatprep.subr.bf16.mxu0 0
  %601 = vmatpush1.bf16.msra.mxu0 %v463
  %602 = vmatprep.subr.bf16.mxu0 0
  %603 = vmatpush1.bf16.msra.mxu0 %v464
  %604 = vmatprep.subr.bf16.mxu0 0
  %605 = vmatpush1.bf16.msra.mxu0 %v465
  %606 = vmatprep.subr.bf16.mxu0 0
  %607 = vmatpush1.bf16.msra.mxu0 %v466
  %608 = vmatprep.subr.bf16.mxu0 0
  %609 = vmatpush1.bf16.msra.mxu0 %v467
  %610 = vmatprep.subr.bf16.mxu0 0
  %611 = vmatpush1.bf16.msra.mxu0 %v468
  %612 = vmatprep.subr.bf16.mxu0 0
  %613 = vmatpush1.bf16.msra.mxu0 %v469
  %614 = vmatprep.mubr.bf16.mxu0 %v183
  %615 = vmatmul.mubr.bf16.gmra.mrb[0].mxu0 %v182
  %v616 = vpop.f32.mrb[0].mxu0
  %v617 = vadd.f32 %v156, %v616
  %v618 = vpop.f32.mrb[0].mxu0
  %v619 = vpop.f32.mrb[0].mxu0
  %v620 = vadd.f32 %v156, %v619
  %v621 = vpop.f32.mrb[0].mxu0
  %622 = vdwg.mxu0
  %623 = vmatprep.subr.bf16.mxu0 0
  %624 = vmatpush1.bf16.msra.mxu0 %v470
  %625 = vmatprep.subr.bf16.mxu0 0
  %626 = vmatpush1.bf16.msra.mxu0 %v471
  %627 = vmatprep.subr.bf16.mxu0 0
  %628 = vmatpush1.bf16.msra.mxu0 %v472
  %629 = vmatprep.subr.bf16.mxu0 0
  %630 = vmatpush1.bf16.msra.mxu0 %v473
  %631 = vmatprep.subr.bf16.mxu0 0
  %632 = vmatpush1.bf16.msra.mxu0 %v474
  %633 = vmatprep.subr.bf16.mxu0 0
  %634 = vmatpush1.bf16.msra.mxu0 %v475
  %635 = vmatprep.subr.bf16.mxu0 0
  %636 = vmatpush1.bf16.msra.mxu0 %v476
  %637 = vmatprep.subr.bf16.mxu0 0
  %638 = vmatpush1.bf16.msra.mxu0 %v477
  %639 = vmatprep.subr.bf16.mxu0 0
  %640 = vmatpush1.bf16.msra.mxu0 %v478
  %641 = vmatprep.subr.bf16.mxu0 0
  %642 = vmatpush1.bf16.msra.mxu0 %v479
  %643 = vmatprep.subr.bf16.mxu0 0
  %644 = vmatpush1.bf16.msra.mxu0 %v480
  %645 = vmatprep.subr.bf16.mxu0 0
  %646 = vmatpush1.bf16.msra.mxu0 %v481
  %647 = vmatprep.subr.bf16.mxu0 0
  %648 = vmatpush1.bf16.msra.mxu0 %v482
  %649 = vmatprep.subr.bf16.mxu0 0
  %650 = vmatpush1.bf16.msra.mxu0 %v483
  %651 = vmatprep.subr.bf16.mxu0 0
  %652 = vmatpush1.bf16.msra.mxu0 %v484
  %653 = vmatprep.subr.bf16.mxu0 0
  %654 = vmatpush1.bf16.msra.mxu0 %v485
  %655 = vmatprep.mubr.bf16.mxu0 %v185
  %656 = vmatmul.mubr.bf16.gmra.mrb[0].mxu0 %v184
  %v657 = vpop.f32.mrb[0].mxu0
  %v658 = vadd.f32 %v617, %v657
  %v659 = vpop.f32.mrb[0].mxu0
  %v660 = vpop.f32.mrb[0].mxu0
  %v661 = vadd.f32 %v620, %v660
  %v662 = vpop.f32.mrb[0].mxu0
  %663 = vdwg.mxu0
  %664 = vmatprep.subr.bf16.mxu0 0
  %665 = vmatpush1.bf16.msra.mxu0 %v486
  %666 = vmatprep.subr.bf16.mxu0 0
  %667 = vmatpush1.bf16.msra.mxu0 %v487
  %668 = vmatprep.subr.bf16.mxu0 0
  %669 = vmatpush1.bf16.msra.mxu0 %v488
  %670 = vmatprep.subr.bf16.mxu0 0
  %671 = vmatpush1.bf16.msra.mxu0 %v489
  %672 = vmatprep.subr.bf16.mxu0 0
  %673 = vmatpush1.bf16.msra.mxu0 %v490
  %674 = vmatprep.subr.bf16.mxu0 0
  %675 = vmatpush1.bf16.msra.mxu0 %v491
  %676 = vmatprep.subr.bf16.mxu0 0
  %677 = vmatpush1.bf16.msra.mxu0 %v492
  %678 = vmatprep.subr.bf16.mxu0 0
  %679 = vmatpush1.bf16.msra.mxu0 %v493
  %680 = vmatprep.subr.bf16.mxu0 0
  %681 = vmatpush1.bf16.msra.mxu0 %v494
  %682 = vmatprep.subr.bf16.mxu0 0
  %683 = vmatpush1.bf16.msra.mxu0 %v495
  %684 = vmatprep.subr.bf16.mxu0 0
  %685 = vmatpush1.bf16.msra.mxu0 %v496
  %686 = vmatprep.subr.bf16.mxu0 0
  %687 = vmatpush1.bf16.msra.mxu0 %v497
  %688 = vmatprep.subr.bf16.mxu0 0
  %689 = vmatpush1.bf16.msra.mxu0 %v498
  %690 = vmatprep.subr.bf16.mxu0 0
  %691 = vmatpush1.bf16.msra.mxu0 %v499
  %692 = vmatprep.subr.bf16.mxu0 0
  %693 = vmatpush1.bf16.msra.mxu0 %v500
  %694 = vmatprep.subr.bf16.mxu0 0
  %695 = vmatpush1.bf16.msra.mxu0 %v501
  %696 = vmatprep.mubr.bf16.mxu0 %v187
  %697 = vmatmul.mubr.bf16.gmra.mrb[0].mxu0 %v186
  %v698 = vpop.f32.mrb[0].mxu0
  %v699 = vadd.f32 %v658, %v698
  %v700 = vpop.f32.mrb[0].mxu0
  %v701 = vpop.f32.mrb[0].mxu0
  %v702 = vadd.f32 %v661, %v701
  %v703 = vpop.f32.mrb[0].mxu0
  %704 = vdwg.mxu0
  %705 = vmatprep.subr.bf16.mxu0 0
  %706 = vmatpush1.bf16.msra.mxu0 %v502
  %707 = vmatprep.subr.bf16.mxu0 0
  %708 = vmatpush1.bf16.msra.mxu0 %v503
  %709 = vmatprep.subr.bf16.mxu0 0
  %710 = vmatpush1.bf16.msra.mxu0 %v504
  %711 = vmatprep.subr.bf16.mxu0 0
  %712 = vmatpush1.bf16.msra.mxu0 %v505
  %713 = vmatprep.subr.bf16.mxu0 0
  %714 = vmatpush1.bf16.msra.mxu0 %v506
  %715 = vmatprep.subr.bf16.mxu0 0
  %716 = vmatpush1.bf16.msra.mxu0 %v507
  %717 = vmatprep.subr.bf16.mxu0 0
  %718 = vmatpush1.bf16.msra.mxu0 %v508
  %719 = vmatprep.subr.bf16.mxu0 0
  %720 = vmatpush1.bf16.msra.mxu0 %v509
  %721 = vmatprep.subr.bf16.mxu0 0
  %722 = vmatpush1.bf16.msra.mxu0 %v510
  %723 = vmatprep.subr.bf16.mxu0 0
  %724 = vmatpush1.bf16.msra.mxu0 %v511
  %725 = vmatprep.subr.bf16.mxu0 0
  %726 = vmatpush1.bf16.msra.mxu0 %v512
  %727 = vmatprep.subr.bf16.mxu0 0
  %728 = vmatpush1.bf16.msra.mxu0 %v513
  %729 = vmatprep.subr.bf16.mxu0 0
  %730 = vmatpush1.bf16.msra.mxu0 %v514
  %731 = vmatprep.subr.bf16.mxu0 0
  %732 = vmatpush1.bf16.msra.mxu0 %v515
  %733 = vmatprep.subr.bf16.mxu0 0
  %734 = vmatpush1.bf16.msra.mxu0 %v516
  %735 = vmatprep.subr.bf16.mxu0 0
  %736 = vmatpush1.bf16.msra.mxu0 %v517
  %737 = vmatprep.mubr.bf16.mxu0 %v189
  %738 = vmatmul.mubr.bf16.gmra.mrb[0].mxu0 %v188
  %v739 = vpop.f32.mrb[0].mxu0
  %v740 = vadd.f32 %v699, %v739
  %v741 = vpop.f32.mrb[0].mxu0
  %v742 = vpop.f32.mrb[0].mxu0
  %v743 = vadd.f32 %v702, %v742
  %v744 = vpop.f32.mrb[0].mxu0
  %745 = vdwg.mxu0
  %v746 = vmax.f32 %v740, 0.0
  %v747 = vmax.f32 %v743, 0.0
  %v749 = vrot.slane %v746, 4
  %v751 = vadd.f32 %v746, %v749
  %v752 = vmul.f32 %v751, 0.5
  %753 = vst [vmem:[#allocation2] sm:$0xff] 0.0
  %754 = vst [vmem:[#allocation2 + $0x8] sm:$0xff] 0.0
  %755 = vst [vmem:[#allocation2 + $0x10] sm:$0xff] 0.0
  %756 = vst [vmem:[#allocation2 + $0x18] sm:$0xff] 0.0
  %757 = vst [vmem:[#allocation2 + $0x20] sm:$0xff] 0.0
  %758 = vst [vmem:[#allocation2 + $0x28] sm:$0xff] 0.0
  %759 = vst [vmem:[#allocation2 + $0x30] sm:$0xff] 0.0
  %760 = vst [vmem:[#allocation2 + $0x38] sm:$0xff] 0.0
  %761 = vst [vmem:[#allocation2 + $0x40] sm:$0xff] 0.0
  %762 = vst [vmem:[#allocation2 + $0x48] sm:$0xff] 0.0
  %763 = vst [vmem:[#allocation2 + $0x50] sm:$0xff] 0.0
  %764 = vst [vmem:[#allocation2 + $0x58] sm:$0xff] 0.0
  %765 = vst [vmem:[#allocation2 + $0x60] sm:$0xff] 0.0
  %766 = vst [vmem:[#allocation2 + $0x68] sm:$0xff] 0.0
  %767 = vst [vmem:[#allocation2 + $0x70] sm:$0xff] 0.0
  %768 = vst [vmem:[#allocation2 + $0x78] sm:$0xff] 0.0
  %769 = vst [vmem:[#allocation2] sm:$0xf] %v752
  %v770 = vld [vmem:[#allocation2] sm:$0xff]
  %v771 = vld [vmem:[#allocation2 + $0x8] sm:$0xff]
  %v772 = vld [vmem:[#allocation2 + $0x10] sm:$0xff]
  %v773 = vld [vmem:[#allocation2 + $0x18] sm:$0xff]
  %v774 = vld [vmem:[#allocation2 + $0x20] sm:$0xff]
  %v775 = vld [vmem:[#allocation2 + $0x28] sm:$0xff]
  %v776 = vld [vmem:[#allocation2 + $0x30] sm:$0xff]
  %v777 = vld [vmem:[#allocation2 + $0x38] sm:$0xff]
  %v778 = vld [vmem:[#allocation2 + $0x40] sm:$0xff]
  %v779 = vld [vmem:[#allocation2 + $0x48] sm:$0xff]
  %v780 = vld [vmem:[#allocation2 + $0x50] sm:$0xff]
  %v781 = vld [vmem:[#allocation2 + $0x58] sm:$0xff]
  %v782 = vld [vmem:[#allocation2 + $0x60] sm:$0xff]
  %v783 = vld [vmem:[#allocation2 + $0x68] sm:$0xff]
  %v784 = vld [vmem:[#allocation2 + $0x70] sm:$0xff]
  %v785 = vld [vmem:[#allocation2 + $0x78] sm:$0xff]
  %v786 = vmul.f32 %v747, %v747
  %787 = vadd.xlane.f32.xlu0 %v786
  %v788 = vpop.xlane.xlu0 %787
  %v789 = vmul.f32 %v770, %v770
  %v790 = vmul.f32 %v771, %v771
  %v791 = vmul.f32 %v772, %v772
  %v792 = vmul.f32 %v773, %v773
  %v793 = vmul.f32 %v774, %v774
  %v794 = vmul.f32 %v775, %v775
  %v795 = vmul.f32 %v776, %v776
  %v796 = vmul.f32 %v777, %v777
  %v797 = vmul.f32 %v778, %v778
  %v798 = vmul.f32 %v779, %v779
  %v799 = vmul.f32 %v780, %v780
  %v800 = vmul.f32 %v781, %v781
  %v801 = vmul.f32 %v782, %v782
  %v802 = vmul.f32 %v783, %v783
  %v803 = vmul.f32 %v784, %v784
  %v804 = vmul.f32 %v785, %v785
  %805 = vadd.xlane.f32.xlu0 %v789
  %v806 = vpop.xlane.xlu0 %805
  %807 = vadd.xlane.f32.xlu0 %v790
  %v808 = vpop.xlane.xlu0 %807
  %809 = vadd.xlane.f32.xlu0 %v791
  %v810 = vpop.xlane.xlu0 %809
  %811 = vadd.xlane.f32.xlu0 %v792
  %v812 = vpop.xlane.xlu0 %811
  %813 = vadd.xlane.f32.xlu0 %v793
  %v814 = vpop.xlane.xlu0 %813
  %815 = vadd.xlane.f32.xlu0 %v794
  %v816 = vpop.xlane.xlu0 %815
  %817 = vadd.xlane.f32.xlu0 %v795
  %v818 = vpop.xlane.xlu0 %817
  %819 = vadd.xlane.f32.xlu0 %v796
  %v820 = vpop.xlane.xlu0 %819
  %821 = vadd.xlane.f32.xlu0 %v797
  %v822 = vpop.xlane.xlu0 %821
  %823 = vadd.xlane.f32.xlu0 %v798
  %v824 = vpop.xlane.xlu0 %823
  %825 = vadd.xlane.f32.xlu0 %v799
  %v826 = vpop.xlane.xlu0 %825
  %827 = vadd.xlane.f32.xlu0 %v800
  %v828 = vpop.xlane.xlu0 %827
  %829 = vadd.xlane.f32.xlu0 %v801
  %v830 = vpop.xlane.xlu0 %829
  %831 = vadd.xlane.f32.xlu0 %v802
  %v832 = vpop.xlane.xlu0 %831
  %833 = vadd.xlane.f32.xlu0 %v803
  %v834 = vpop.xlane.xlu0 %833
  %835 = vadd.xlane.f32.xlu0 %v804
  %v836 = vpop.xlane.xlu0 %835
  %837 = vmatprep.subr.mxu0 0.0
  %838 = vmatpush1.xpose.msra.mxu0 %v770
  %839 = vmatprep.subr.mxu0 0.0
  %840 = vmatpush1.xpose.msra.mxu0 %v771
  %841 = vmatprep.subr.mxu0 0.0
  %842 = vmatpush1.xpose.msra.mxu0 %v772
  %843 = vmatprep.subr.mxu0 0.0
  %844 = vmatpush1.xpose.msra.mxu0 %v773
  %845 = vmatprep.subr.mxu0 0.0
  %846 = vmatpush1.xpose.msra.mxu0 %v774
  %847 = vmatprep.subr.mxu0 0.0
  %848 = vmatpush1.xpose.msra.mxu0 %v775
  %849 = vmatprep.subr.mxu0 0.0
  %850 = vmatpush1.xpose.msra.mxu0 %v776
  %851 = vmatprep.subr.mxu0 0.0
  %852 = vmatpush1.xpose.msra.mxu0 %v777
  %853 = vmatprep.subr.mxu0 0.0
  %854 = vmatpush1.xpose.msra.mxu0 %v778
  %855 = vmatprep.subr.mxu0 0.0
  %856 = vmatpush1.xpose.msra.mxu0 %v779
  %857 = vmatprep.subr.mxu0 0.0
  %858 = vmatpush1.xpose.msra.mxu0 %v780
  %859 = vmatprep.subr.mxu0 0.0
  %860 = vmatpush1.xpose.msra.mxu0 %v781
  %861 = vmatprep.subr.mxu0 0.0
  %862 = vmatpush1.xpose.msra.mxu0 %v782
  %863 = vmatprep.subr.mxu0 0.0
  %864 = vmatpush1.xpose.msra.mxu0 %v783
  %865 = vmatprep.subr.mxu0 0.0
  %866 = vmatpush1.xpose.msra.mxu0 %v784
  %867 = vmatprep.subr.mxu0 0.0
  %868 = vmatpush1.xpose.msra.mxu0 %v785
  %869 = vmatprep.subr.mxu0 0.0
  %870 = vmatpush1.xpose.msra.mxu0 0.0
  %871 = vmatprep.subr.mxu0 0.0
  %872 = vmatpush1.xpose.msra.mxu0 0.0
  %873 = vmatprep.subr.mxu0 0.0
  %874 = vmatpush1.xpose.msra.mxu0 0.0
  %875 = vmatprep.subr.mxu0 0.0
  %876 = vmatpush1.xpose.msra.mxu0 0.0
  %877 = vmatprep.subr.mxu0 0.0
  %878 = vmatpush1.xpose.msra.mxu0 0.0
  %879 = vmatprep.subr.mxu0 0.0
  %880 = vmatpush1.xpose.msra.mxu0 0.0
  %881 = vmatprep.subr.mxu0 0.0
  %882 = vmatpush1.xpose.msra.mxu0 0.0
  %883 = vmatprep.subr.mxu0 0.0
  %884 = vmatpush1.xpose.msra.mxu0 0.0
  %885 = vmatprep.subr.mxu0 0.0
  %886 = vmatpush1.xpose.msra.mxu0 0.0
  %887 = vmatprep.subr.mxu0 0.0
  %888 = vmatpush1.xpose.msra.mxu0 0.0
  %889 = vmatprep.subr.mxu0 0.0
  %890 = vmatpush1.xpose.msra.mxu0 0.0
  %891 = vmatprep.subr.mxu0 0.0
  %892 = vmatpush1.xpose.msra.mxu0 0.0
  %893 = vmatprep.subr.mxu0 0.0
  %894 = vmatpush1.xpose.msra.mxu0 0.0
  %895 = vmatprep.subr.mxu0 0.0
  %896 = vmatpush1.xpose.msra.mxu0 0.0
  %897 = vmatprep.subr.mxu0 0.0
  %898 = vmatpush1.xpose.msra.mxu0 0.0
  %899 = vmatprep.subr.mxu0 0.0
  %900 = vmatpush1.xpose.msra.mxu0 0.0
  %901 = vmatprep.mubr.f32.mxu0 0.0
  %902 = vmatmul.mubr.f32.gmra.mrb[0].mxu0 %v747
  %v903 = vpop.f32.mrb[0].mxu0
  %v904 = vadd.f32 0.0, %v903
  %v905 = vpop.f32.mrb[0].mxu0
  %906 = vdwg.mxu0
  %v907 = vmul.f32 %v904, 2.0
  %v908 = vsub.f32 %v788, %v907
  %909 = vxpose.xlu0.b32.start [1/16] %v806, 128
  %910 = vxpose.xlu0.b32.cont [2/16] %v808, 128
  %911 = vxpose.xlu0.b32.cont [3/16] %v810, 128
  %912 = vxpose.xlu0.b32.cont [4/16] %v812, 128
  %913 = vxpose.xlu0.b32.cont [5/16] %v814, 128
  %914 = vxpose.xlu0.b32.cont [6/16] %v816, 128
  %915 = vxpose.xlu0.b32.cont [7/16] %v818, 128
  %916 = vxpose.xlu0.b32.cont [8/16] %v820, 128
  %917 = vxpose.xlu0.b32.cont [9/16] %v822, 128
  %918 = vxpose.xlu0.b32.cont [10/16] %v824, 128
  %919 = vxpose.xlu0.b32.cont [11/16] %v826, 128
  %920 = vxpose.xlu0.b32.cont [12/16] %v828, 128
  %921 = vxpose.xlu0.b32.cont [13/16] %v830, 128
  %922 = vxpose.xlu0.b32.cont [14/16] %v832, 128
  %923 = vxpose.xlu0.b32.cont [15/16] %v834, 128
  %924 = vxpose.xlu0.b32.end [16/16] %v836, 128
  %v925 = vpop.trf.xlu0
  %v926 = vpop.trf.xlu0
  %v927 = vpop.trf.xlu0
  %v928 = vpop.trf.xlu0
  %v929 = vpop.trf.xlu0
  %v930 = vpop.trf.xlu0
  %v931 = vpop.trf.xlu0
  %v932 = vpop.trf.xlu0
  %v933 = vpop.trf.xlu0
  %v934 = vpop.trf.xlu0
  %v935 = vpop.trf.xlu0
  %v936 = vpop.trf.xlu0
  %v937 = vpop.trf.xlu0
  %v938 = vpop.trf.xlu0
  %v939 = vpop.trf.xlu0
  %v940 = vpop.trf.xlu0
  %v941 = vlaneseq
  %v942 = vshrl.u32 %v941, 7
  %v943 = vsub.s32 0, %v942
  %v944 = vrot.slane %v925, %v943
  %v945 = vadd.f32 %v908, %v944
  %v946 = vsub.f32 0.0, %v945
  %947 = vst [vmem:[%s3] sm:$0xff] %v946
  // Predicated region
  $region14: #{protonet_forward.1} parent=0 // pred_check
    _
  $region15: #{protonet_forward.1} parent=0 // pred_check_branch
    %949 = sbr.rel (0) target = $region17
  $region16: #{protonet_forward.1} parent=0 // pred_region
    _
  $region17: #{protonet_forward.1} parent=0 // pred_fallthru
    _
  // Predicated region
  $region18: #{protonet_forward.1} parent=0 // pred_check
    _
  $region19: #{protonet_forward.1} parent=0 // pred_check_branch
    %951 = sbr.rel (0) target = $region21
  $region20: #{protonet_forward.1} parent=0 // pred_region
    _
  $region21: #{protonet_forward.1} parent=0 // pred_fallthru
    _

</llo_original>
